<compile_context>
chip_gen: v7x
topology: tpu7x:2x2x1
jax: 0.10.0
libtpu: 0.0.40
codegen_flags: <defaults>
</compile_context>

<pallas_src>
from functools import partial

import jax
import jax.numpy as jnp
from jax.experimental import pallas as pl
from jax.experimental.pallas import tpu as pltpu

LN_EPS = 1e-5            # torch.nn.LayerNorm default
_SUBLANE = 8             # TPU vreg sublane width (f32)
_INV_SQRT2 = 0.7071067811865476


def _round_up(x, m):
    return (x + m - 1) // m * m


def adapter_kernel(x_ref, gamma_ref, beta_ref, wd_ref, bd_ref, wu_ref, bu_ref,
                   o_ref, *, matmul_dtype, approx_gelu):
    """Fused LayerNorm -> down_proj -> GELU -> up_proj -> +residual, one token tile."""
    x = x_ref[...].astype(jnp.float32)            # (tm, dim)
    inv_d = jnp.float32(1.0 / x.shape[-1])

    # ---- LayerNorm over the (unpadded) feature axis, f32 stats ----
    mean = jnp.sum(x, axis=-1, keepdims=True) * inv_d
    cent = x - mean
    var = jnp.sum(cent * cent, axis=-1, keepdims=True) * inv_d
    xn = cent * jax.lax.rsqrt(var + LN_EPS)
    # Cast to the MXU dtype immediately so the f32 x/cent/xn temporaries die here.
    xn = (xn * gamma_ref[...] + beta_ref[...]).astype(matmul_dtype)

    # ---- down projection (dim -> adapter_dim): MXU, f32 accumulate ----
    h = jnp.dot(xn, wd_ref[...], preferred_element_type=jnp.float32) + bd_ref[...]

    # ---- GELU ----
    if approx_gelu:
        # tanh approximation: runs on the EUP slot, ~1e-3 deviation vs exact erf.
        h = jax.nn.gelu(h, approximate=True)
    else:
        # exact erf (matches torch.nn.GELU() default)
        h = 0.5 * h * (1.0 + jax.lax.erf(h * _INV_SQRT2))

    # ---- up projection (adapter_dim -> dim): MXU, f32 accumulate ----
    y = jnp.dot(h.astype(matmul_dtype), wu_ref[...],
                preferred_element_type=jnp.float32) + bu_ref[...]

    # ---- residual: re-read the x tile (cheap VMEM load) instead of keeping
    #      a persistent f32 copy live across both matmuls ----
    o_ref[...] = (y + x_ref[...].astype(jnp.float32)).astype(o_ref.dtype)


def adapter_block(x, gamma, beta, w_down, b_down, w_up, b_up, *,
                  tm=512, matmul_dtype=jnp.bfloat16, approx_gelu=True):
    """x: (B, N, dim). w_down: (dim, adapter_dim), w_up: (adapter_dim, dim)
    (already transposed from PyTorch's (out, in) Linear layout).
    Set matmul_dtype=jnp.float32 and approx_gelu=False for exact torch semantics."""
    B, N, dim = x.shape
    adapter_dim = w_down.shape[1]
    M = B * N
    x2 = x.reshape(M, dim)            # no padding; kernel handles ragged last tile

    # Token tile: multiple of 8 sublanes, as large as requested, but small
    # enough that the grid has >= 2 steps when M allows (v7x megacore) and no
    # bigger than the rounded-up token count.
    tm_eff = _round_up(max(min(tm, M), 1), _SUBLANE)
    half_m = _round_up(pl.cdiv(M, 2), _SUBLANE)
    tm_eff = max(_SUBLANE, min(tm_eff, half_m))

    # VMEM budget from the actual chip (75% of physical capacity).
    try:
        vmem_cap = int(pltpu.get_tpu_info().vmem_capacity_bytes)
    except Exception:
        vmem_cap = 64 * 1024 * 1024   # conservative fallback (v7x physical VMEM)
    budget = (vmem_cap * 3) // 4

    io_bpe = jnp.dtype(x.dtype).itemsize
    mm_bpe = jnp.dtype(matmul_dtype).itemsize
    param_bytes = 2 * dim * adapter_dim * mm_bpe + (3 * dim + adapter_dim) * 4

    def _vmem_need(t):
        tiles = 2 * 2 * t * dim * io_bpe              # double-buffered x / out tiles
        work = 3 * 4 * t * (dim + adapter_dim)        # f32 temporaries (xn/h/y)
        return tiles + param_bytes + work

    # Auto-shrink the token tile if the estimated working set would blow VMEM
    # (matters for very large dim on v7x's 64 MiB).
    while tm_eff > _SUBLANE and 2 * _vmem_need(tm_eff) > budget:
        tm_eff = max(_SUBLANE, _round_up(tm_eff // 2, _SUBLANE))

    grid_m = pl.cdiv(M, tm_eff)
    vmem_limit = int(min(max(2 * _vmem_need(tm_eff), 32 * 1024 * 1024), budget))

    # Params as 2-D slabs (full-extent blocks, no padding needed).
    gamma2 = gamma.astype(jnp.float32).reshape(1, dim)
    beta2 = beta.astype(jnp.float32).reshape(1, dim)
    wd = w_down.astype(matmul_dtype)
    wu = w_up.astype(matmul_dtype)
    bd2 = b_down.astype(jnp.float32).reshape(1, adapter_dim)
    bu2 = b_up.astype(jnp.float32).reshape(1, dim)

    kernel = partial(adapter_kernel, matmul_dtype=matmul_dtype,
                     approx_gelu=approx_gelu)

    def _call(single_buffer_params):
        def param_spec(shape):
            if single_buffer_params:
                # Grid-invariant operands: one buffer is enough (index_map constant).
                return pl.BlockSpec(shape, lambda i: (0, 0),
                                    pipeline_mode=pl.Buffered(1))
            return pl.BlockSpec(shape, lambda i: (0, 0))

        return pl.pallas_call(
            kernel,
            out_shape=jax.ShapeDtypeStruct((M, dim), x.dtype),
            grid_spec=pltpu.PrefetchScalarGridSpec(
                num_scalar_prefetch=0,
                grid=(grid_m,),
                in_specs=[
                    pl.BlockSpec((tm_eff, dim), lambda i: (i, 0)),   # x tile
                    param_spec((1, dim)),                            # gamma
                    param_spec((1, dim)),                            # beta
                    param_spec((dim, adapter_dim)),                  # W_down
                    param_spec((1, adapter_dim)),                    # b_down
                    param_spec((adapter_dim, dim)),                  # W_up
                    param_spec((1, dim)),                            # b_up
                ],
                out_specs=pl.BlockSpec((tm_eff, dim), lambda i: (i, 0)),
            ),
            compiler_params=pltpu.CompilerParams(
                dimension_semantics=("parallel",),
                vmem_limit_bytes=vmem_limit),
        )(x2, gamma2, beta2, wd, bd2, wu, bu2)

    if hasattr(pl, "Buffered"):
        try:
            out = _call(True)
        except Exception:
            # TODO(synk): drop this fallback once pipeline_mode=pl.Buffered(1) is
            # guaranteed on all deployed jax versions.
            out = _call(False)
    else:
        out = _call(False)

    return out.reshape(B, N, dim)


def reference_adapter(x, gamma, beta, w_down, b_down, w_up, b_up):
    """Plain-JAX f32 reference mirroring the PyTorch forward (exact erf GELU)."""
    x = x.astype(jnp.float32)
    mean = jnp.mean(x, axis=-1, keepdims=True)
    var = jnp.mean((x - mean) ** 2, axis=-1, keepdims=True)
    xn = (x - mean) / jnp.sqrt(var + LN_EPS) * gamma + beta
    h = xn @ w_down.astype(jnp.float32) + b_down
    h = 0.5 * h * (1.0 + jax.lax.erf(h / jnp.sqrt(2.0)))
    y = h @ w_up.astype(jnp.float32) + b_up
    return y + x


if __name__ == "__main__":
    key = jax.random.PRNGKey(0)

    def make_case(k, B, N, dim, adapter_dim, w_std_down, w_std_up,
                  bias_scale=0.0, io_dtype=jnp.float32):
        kx, kg, kb, kd, ku, kbd, kbu = jax.random.split(k, 7)
        x = jax.random.normal(kx, (B, N, dim), dtype=jnp.float32).astype(io_dtype)
        gamma = 1.0 + 0.1 * jax.random.normal(kg, (dim,), dtype=jnp.float32)
        beta = 0.1 * jax.random.normal(kb, (dim,), dtype=jnp.float32)
        # PyTorch Linear weight is (out, in); store transposed (in, out) for x @ W.
        w_down = (w_std_down * jax.random.normal(kd, (adapter_dim, dim), jnp.float32)).T
        w_up = (w_std_up * jax.random.normal(ku, (dim, adapter_dim), jnp.float32)).T
        b_down = bias_scale * jax.random.normal(kbd, (adapter_dim,), jnp.float32)
        b_up = bias_scale * jax.random.normal(kbu, (dim,), jnp.float32)
        return x, gamma, beta, w_down, b_down, w_up, b_up

    k1, k2, k3 = jax.random.split(key, 3)

    # Case 1: module-default init (std=0.001 weights, zero biases), exact path
    # (f32 matmuls + exact erf GELU) -> tight tolerance vs the f32 reference.
    args1 = make_case(k1, 2, 8, 32, 8, 0.001, 0.001, bias_scale=0.0)
    out1 = jax.block_until_ready(
        adapter_block(*args1, matmul_dtype=jnp.float32, approx_gelu=False))
    ref1 = reference_adapter(*args1)
    assert out1.shape == args1[0].shape and out1.dtype == args1[0].dtype
    assert jnp.allclose(out1, ref1, atol=1e-5, rtol=1e-5), "case 1 mismatch vs reference"

    # Case 2: realistic weight magnitudes, default fast path (bf16 MXU + tanh
    # GELU), ragged grid (M=144, tm=64) with no wrapper padding.  Loose
    # tolerance reflects bf16 matmuls + approximate GELU at realistic scales.
    args2 = make_case(k2, 2, 72, 256, 64, 256 ** -0.5, 64 ** -0.5, bias_scale=0.01)
    out2 = jax.block_until_ready(adapter_block(*args2, tm=64))
    ref2 = reference_adapter(*args2)
    assert out2.shape == args2[0].shape
    assert jnp.allclose(out2, ref2, atol=5e-2, rtol=5e-2), "case 2 mismatch vs reference"

    # Case 3: bf16 activations in/out (halves HBM traffic), default fast path.
    args3 = make_case(k3, 2, 24, 128, 32, 128 ** -0.5, 32 ** -0.5,
                      bias_scale=0.01, io_dtype=jnp.bfloat16)
    out3 = jax.block_until_ready(adapter_block(*args3))
    ref3 = reference_adapter(*args3)
    assert out3.shape == args3[0].shape and out3.dtype == jnp.bfloat16
    assert jnp.allclose(out3.astype(jnp.float32), ref3, atol=5e-2, rtol=5e-2), \
        "case 3 mismatch vs reference"

    print("KERNEL_OK")
</pallas_src>

<mosaic_0001>
module attributes {stable_mosaic.version = 11 : i64} {
  func.func @adapter_kernel(%arg0: i32, %arg1: memref<8x32xf32, #tpu.memory_space<vmem>>, %arg2: memref<1x32xf32, #tpu.memory_space<vmem>>, %arg3: memref<1x32xf32, #tpu.memory_space<vmem>>, %arg4: memref<32x8xf32, #tpu.memory_space<vmem>>, %arg5: memref<1x8xf32, #tpu.memory_space<vmem>>, %arg6: memref<8x32xf32, #tpu.memory_space<vmem>>, %arg7: memref<1x32xf32, #tpu.memory_space<vmem>>, %arg8: memref<8x32xf32, #tpu.memory_space<vmem>>) attributes {dimension_semantics = [#tpu.dimension_semantics<parallel>], iteration_bounds = array<i64: 2>, scalar_prefetch = 0 : i64, scratch_operands = 0 : i64, tpu.core_type = #tpu.core_type<tc>, window_params = [{transform_indices = @transform_0, window_bounds = array<i64: 8, 32>}, {pipeline_mode = #tpu.pipeline_mode<synchronous>, transform_indices = @transform_1, window_bounds = array<i64: 1, 32>}, {pipeline_mode = #tpu.pipeline_mode<synchronous>, transform_indices = @transform_2, window_bounds = array<i64: 1, 32>}, {pipeline_mode = #tpu.pipeline_mode<synchronous>, transform_indices = @transform_3, window_bounds = array<i64: 32, 8>}, {pipeline_mode = #tpu.pipeline_mode<synchronous>, transform_indices = @transform_4, window_bounds = array<i64: 1, 8>}, {pipeline_mode = #tpu.pipeline_mode<synchronous>, transform_indices = @transform_5, window_bounds = array<i64: 8, 32>}, {pipeline_mode = #tpu.pipeline_mode<synchronous>, transform_indices = @transform_6, window_bounds = array<i64: 1, 32>}, {transform_indices = @transform_7, window_bounds = array<i64: 8, 32>}]} {
    %c0 = arith.constant 0 : index
    %c0_0 = arith.constant 0 : index
    %0 = vector.load %arg1[%c0, %c0_0] : memref<8x32xf32, #tpu.memory_space<vmem>>, vector<8x32xf32>
    %cst = arith.constant dense<0.000000e+00> : vector<8xf32>
    %1 = vector.multi_reduction <add>, %0, %cst [1] : vector<8x32xf32> to vector<8xf32>
    %2 = vector.shape_cast %1 : vector<8xf32> to vector<8x1xf32>
    %cst_1 = arith.constant 3.125000e-02 : f32
    %3 = vector.broadcast %cst_1 : f32 to vector<8x1xf32>
    %4 = arith.mulf %2, %3 : vector<8x1xf32>
    %5 = vector.broadcast %4 : vector<8x1xf32> to vector<8x32xf32>
    %6 = arith.subf %0, %5 : vector<8x32xf32>
    %7 = arith.mulf %6, %6 : vector<8x32xf32>
    %cst_2 = arith.constant dense<0.000000e+00> : vector<8xf32>
    %8 = vector.multi_reduction <add>, %7, %cst_2 [1] : vector<8x32xf32> to vector<8xf32>
    %9 = vector.shape_cast %8 : vector<8xf32> to vector<8x1xf32>
    %cst_3 = arith.constant 3.125000e-02 : f32
    %10 = vector.broadcast %cst_3 : f32 to vector<8x1xf32>
    %11 = arith.mulf %9, %10 : vector<8x1xf32>
    %cst_4 = arith.constant 9.99999974E-6 : f32
    %12 = vector.broadcast %cst_4 : f32 to vector<8x1xf32>
    %13 = arith.addf %11, %12 : vector<8x1xf32>
    %14 = math.rsqrt %13 : vector<8x1xf32>
    %15 = vector.broadcast %14 : vector<8x1xf32> to vector<8x32xf32>
    %16 = arith.mulf %6, %15 : vector<8x32xf32>
    %c0_5 = arith.constant 0 : index
    %c0_6 = arith.constant 0 : index
    %17 = vector.load %arg2[%c0_5, %c0_6] : memref<1x32xf32, #tpu.memory_space<vmem>>, vector<1x32xf32>
    %18 = vector.broadcast %17 : vector<1x32xf32> to vector<8x32xf32>
    %19 = arith.mulf %16, %18 : vector<8x32xf32>
    %c0_7 = arith.constant 0 : index
    %c0_8 = arith.constant 0 : index
    %20 = vector.load %arg3[%c0_7, %c0_8] : memref<1x32xf32, #tpu.memory_space<vmem>>, vector<1x32xf32>
    %21 = vector.broadcast %20 : vector<1x32xf32> to vector<8x32xf32>
    %22 = arith.addf %19, %21 : vector<8x32xf32>
    %c0_9 = arith.constant 0 : index
    %c0_10 = arith.constant 0 : index
    %23 = vector.load %arg4[%c0_9, %c0_10] : memref<32x8xf32, #tpu.memory_space<vmem>>, vector<32x8xf32>
    %cst_11 = arith.constant dense<0.000000e+00> : vector<8x8xf32>
    %24 = tpu.matmul %22, %23, %cst_11 {dimension_numbers = #tpu.dot_dimension_numbers<[1], [0], [0], [1], [0, 0, 1, 1], [], []>} : vector<8x32xf32>, vector<32x8xf32>, vector<8x8xf32> -> vector<8x8xf32>
    %c0_12 = arith.constant 0 : index
    %c0_13 = arith.constant 0 : index
    %25 = vector.load %arg5[%c0_12, %c0_13] : memref<1x8xf32, #tpu.memory_space<vmem>>, vector<1x8xf32>
    %26 = vector.broadcast %25 : vector<1x8xf32> to vector<8x8xf32>
    %27 = arith.addf %24, %26 : vector<8x8xf32>
    %cst_14 = arith.constant 5.000000e-01 : f32
    %28 = vector.broadcast %cst_14 : f32 to vector<8x8xf32>
    %29 = arith.mulf %28, %27 : vector<8x8xf32>
    %cst_15 = arith.constant 0.707106769 : f32
    %30 = vector.broadcast %cst_15 : f32 to vector<8x8xf32>
    %31 = arith.mulf %27, %30 : vector<8x8xf32>
    %32 = math.erf %31 : vector<8x8xf32>
    %cst_16 = arith.constant 1.000000e+00 : f32
    %33 = vector.broadcast %cst_16 : f32 to vector<8x8xf32>
    %34 = arith.addf %33, %32 : vector<8x8xf32>
    %35 = arith.mulf %29, %34 : vector<8x8xf32>
    %c0_17 = arith.constant 0 : index
    %c0_18 = arith.constant 0 : index
    %36 = vector.load %arg6[%c0_17, %c0_18] : memref<8x32xf32, #tpu.memory_space<vmem>>, vector<8x32xf32>
    %cst_19 = arith.constant dense<0.000000e+00> : vector<8x32xf32>
    %37 = tpu.matmul %35, %36, %cst_19 {dimension_numbers = #tpu.dot_dimension_numbers<[1], [0], [0], [1], [0, 0, 1, 1], [], []>} : vector<8x8xf32>, vector<8x32xf32>, vector<8x32xf32> -> vector<8x32xf32>
    %c0_20 = arith.constant 0 : index
    %c0_21 = arith.constant 0 : index
    %38 = vector.load %arg7[%c0_20, %c0_21] : memref<1x32xf32, #tpu.memory_space<vmem>>, vector<1x32xf32>
    %39 = vector.broadcast %38 : vector<1x32xf32> to vector<8x32xf32>
    %40 = arith.addf %37, %39 : vector<8x32xf32>
    %c0_22 = arith.constant 0 : index
    %c0_23 = arith.constant 0 : index
    %41 = vector.load %arg1[%c0_22, %c0_23] : memref<8x32xf32, #tpu.memory_space<vmem>>, vector<8x32xf32>
    %42 = arith.addf %40, %41 : vector<8x32xf32>
    %c0_24 = arith.constant 0 : index
    %c0_25 = arith.constant 0 : index
    %43 = vector.load %arg8[%c0_24, %c0_25] : memref<8x32xf32, #tpu.memory_space<vmem>>, vector<8x32xf32>
    tpu.vector_store %arg8[%c0_24, %c0_25], %42 {strides = array<i32>} : memref<8x32xf32, #tpu.memory_space<vmem>>, vector<8x32xf32>,
    return
  }
  func.func @transform_0(%arg0: i32) -> (i32, i32) {
    %c0_i32 = arith.constant 0 : i32
    %c0_i32_0 = arith.constant 0 : i32
    return %arg0, %c0_i32 : i32, i32
  }
  func.func @transform_1(%arg0: i32) -> (i32, i32) {
    %c0_i32 = arith.constant 0 : i32
    %c0_i32_0 = arith.constant 0 : i32
    %c0_i32_1 = arith.constant 0 : i32
    return %c0_i32, %c0_i32_0 : i32, i32
  }
  func.func @transform_2(%arg0: i32) -> (i32, i32) {
    %c0_i32 = arith.constant 0 : i32
    %c0_i32_0 = arith.constant 0 : i32
    %c0_i32_1 = arith.constant 0 : i32
    return %c0_i32, %c0_i32_0 : i32, i32
  }
  func.func @transform_3(%arg0: i32) -> (i32, i32) {
    %c0_i32 = arith.constant 0 : i32
    %c0_i32_0 = arith.constant 0 : i32
    %c0_i32_1 = arith.constant 0 : i32
    return %c0_i32, %c0_i32_0 : i32, i32
  }
  func.func @transform_4(%arg0: i32) -> (i32, i32) {
    %c0_i32 = arith.constant 0 : i32
    %c0_i32_0 = arith.constant 0 : i32
    %c0_i32_1 = arith.constant 0 : i32
    return %c0_i32, %c0_i32_0 : i32, i32
  }
  func.func @transform_5(%arg0: i32) -> (i32, i32) {
    %c0_i32 = arith.constant 0 : i32
    %c0_i32_0 = arith.constant 0 : i32
    %c0_i32_1 = arith.constant 0 : i32
    return %c0_i32, %c0_i32_0 : i32, i32
  }
  func.func @transform_6(%arg0: i32) -> (i32, i32) {
    %c0_i32 = arith.constant 0 : i32
    %c0_i32_0 = arith.constant 0 : i32
    %c0_i32_1 = arith.constant 0 : i32
    return %c0_i32, %c0_i32_0 : i32, i32
  }
  func.func @transform_7(%arg0: i32) -> (i32, i32) {
    %c0_i32 = arith.constant 0 : i32
    %c0_i32_0 = arith.constant 0 : i32
    return %arg0, %c0_i32 : i32, i32
  }
}

module attributes {stable_mosaic.version = 11 : i64} {
  func.func @adapter_kernel(%arg0: i32, %arg1: memref<8x32xf32, #tpu.memory_space<vmem>>, %arg2: memref<1x32xf32, #tpu.memory_space<vmem>>, %arg3: memref<1x32xf32, #tpu.memory_space<vmem>>, %arg4: memref<32x8xf32, #tpu.memory_space<vmem>>, %arg5: memref<1x8xf32, #tpu.memory_space<vmem>>, %arg6: memref<8x32xf32, #tpu.memory_space<vmem>>, %arg7: memref<1x32xf32, #tpu.memory_space<vmem>>, %arg8: memref<8x32xf32, #tpu.memory_space<vmem>>) attributes {dimension_semantics = [#tpu.dimension_semantics<parallel>], iteration_bounds = array<i64: 2>, scalar_prefetch = 0 : i64, scratch_operands = 0 : i64, tpu.core_type = #tpu.core_type<tc>, window_params = [{transform_indices = @transform_0, window_bounds = array<i64: 8, 32>}, {pipeline_mode = #tpu.pipeline_mode<synchronous>, transform_indices = @transform_1, window_bounds = array<i64: 1, 32>}, {pipeline_mode = #tpu.pipeline_mode<synchronous>, transform_indices = @transform_2, window_bounds = array<i64: 1, 32>}, {pipeline_mode = #tpu.pipeline_mode<synchronous>, transform_indices = @transform_3, window_bounds = array<i64: 32, 8>}, {pipeline_mode = #tpu.pipeline_mode<synchronous>, transform_indices = @transform_4, window_bounds = array<i64: 1, 8>}, {pipeline_mode = #tpu.pipeline_mode<synchronous>, transform_indices = @transform_5, window_bounds = array<i64: 8, 32>}, {pipeline_mode = #tpu.pipeline_mode<synchronous>, transform_indices = @transform_6, window_bounds = array<i64: 1, 32>}, {transform_indices = @transform_7, window_bounds = array<i64: 8, 32>}]} {
    %c0 = arith.constant 0 : index
    %c0_0 = arith.constant 0 : index
    %0 = vector.load %arg1[%c0, %c0_0] : memref<8x32xf32, #tpu.memory_space<vmem>>, vector<8x32xf32>
    %cst = arith.constant dense<0.000000e+00> : vector<8xf32>
    %1 = vector.multi_reduction <add>, %0, %cst [1] : vector<8x32xf32> to vector<8xf32>
    %2 = vector.shape_cast %1 : vector<8xf32> to vector<8x1xf32>
    %cst_1 = arith.constant 3.125000e-02 : f32
    %3 = vector.broadcast %cst_1 : f32 to vector<8x1xf32>
    %4 = arith.mulf %2, %3 : vector<8x1xf32>
    %5 = vector.broadcast %4 : vector<8x1xf32> to vector<8x32xf32>
    %6 = arith.subf %0, %5 : vector<8x32xf32>
    %7 = arith.mulf %6, %6 : vector<8x32xf32>
    %cst_2 = arith.constant dense<0.000000e+00> : vector<8xf32>
    %8 = vector.multi_reduction <add>, %7, %cst_2 [1] : vector<8x32xf32> to vector<8xf32>
    %9 = vector.shape_cast %8 : vector<8xf32> to vector<8x1xf32>
    %cst_3 = arith.constant 3.125000e-02 : f32
    %10 = vector.broadcast %cst_3 : f32 to vector<8x1xf32>
    %11 = arith.mulf %9, %10 : vector<8x1xf32>
    %cst_4 = arith.constant 9.99999974E-6 : f32
    %12 = vector.broadcast %cst_4 : f32 to vector<8x1xf32>
    %13 = arith.addf %11, %12 : vector<8x1xf32>
    %14 = math.rsqrt %13 : vector<8x1xf32>
    %15 = vector.broadcast %14 : vector<8x1xf32> to vector<8x32xf32>
    %16 = arith.mulf %6, %15 : vector<8x32xf32>
    %c0_5 = arith.constant 0 : index
    %c0_6 = arith.constant 0 : index
    %17 = vector.load %arg2[%c0_5, %c0_6] : memref<1x32xf32, #tpu.memory_space<vmem>>, vector<1x32xf32>
    %18 = vector.broadcast %17 : vector<1x32xf32> to vector<8x32xf32>
    %19 = arith.mulf %16, %18 : vector<8x32xf32>
    %c0_7 = arith.constant 0 : index
    %c0_8 = arith.constant 0 : index
    %20 = vector.load %arg3[%c0_7, %c0_8] : memref<1x32xf32, #tpu.memory_space<vmem>>, vector<1x32xf32>
    %21 = vector.broadcast %20 : vector<1x32xf32> to vector<8x32xf32>
    %22 = arith.addf %19, %21 : vector<8x32xf32>
    %c0_9 = arith.constant 0 : index
    %c0_10 = arith.constant 0 : index
    %23 = vector.load %arg4[%c0_9, %c0_10] : memref<32x8xf32, #tpu.memory_space<vmem>>, vector<32x8xf32>
    %cst_11 = arith.constant dense<0.000000e+00> : vector<8x8xf32>
    %24 = tpu.matmul %22, %23, %cst_11 {dimension_numbers = #tpu.dot_dimension_numbers<[1], [0], [0], [1], [0, 0, 1, 1], [], []>} : vector<8x32xf32>, vector<32x8xf32>, vector<8x8xf32> -> vector<8x8xf32>
    %c0_12 = arith.constant 0 : index
    %c0_13 = arith.constant 0 : index
    %25 = vector.load %arg5[%c0_12, %c0_13] : memref<1x8xf32, #tpu.memory_space<vmem>>, vector<1x8xf32>
    %26 = vector.broadcast %25 : vector<1x8xf32> to vector<8x8xf32>
    %27 = arith.addf %24, %26 : vector<8x8xf32>
    %cst_14 = arith.constant 5.000000e-01 : f32
    %28 = vector.broadcast %cst_14 : f32 to vector<8x8xf32>
    %29 = arith.mulf %28, %27 : vector<8x8xf32>
    %cst_15 = arith.constant 0.707106769 : f32
    %30 = vector.broadcast %cst_15 : f32 to vector<8x8xf32>
    %31 = arith.mulf %27, %30 : vector<8x8xf32>
    %32 = math.erf %31 : vector<8x8xf32>
    %cst_16 = arith.constant 1.000000e+00 : f32
    %33 = vector.broadcast %cst_16 : f32 to vector<8x8xf32>
    %34 = arith.addf %33, %32 : vector<8x8xf32>
    %35 = arith.mulf %29, %34 : vector<8x8xf32>
    %c0_17 = arith.constant 0 : index
    %c0_18 = arith.constant 0 : index
    %36 = vector.load %arg6[%c0_17, %c0_18] : memref<8x32xf32, #tpu.memory_space<vmem>>, vector<8x32xf32>
    %cst_19 = arith.constant dense<0.000000e+00> : vector<8x32xf32>
    %37 = tpu.matmul %35, %36, %cst_19 {dimension_numbers = #tpu.dot_dimension_numbers<[1], [0], [0], [1], [0, 0, 1, 1], [], []>} : vector<8x8xf32>, vector<8x32xf32>, vector<8x32xf32> -> vector<8x32xf32>
    %c0_20 = arith.constant 0 : index
    %c0_21 = arith.constant 0 : index
    %38 = vector.load %arg7[%c0_20, %c0_21] : memref<1x32xf32, #tpu.memory_space<vmem>>, vector<1x32xf32>
    %39 = vector.broadcast %38 : vector<1x32xf32> to vector<8x32xf32>
    %40 = arith.addf %37, %39 : vector<8x32xf32>
    %c0_22 = arith.constant 0 : index
    %c0_23 = arith.constant 0 : index
    %41 = vector.load %arg1[%c0_22, %c0_23] : memref<8x32xf32, #tpu.memory_space<vmem>>, vector<8x32xf32>
    %42 = arith.addf %40, %41 : vector<8x32xf32>
    %c0_24 = arith.constant 0 : index
    %c0_25 = arith.constant 0 : index
    %43 = vector.load %arg8[%c0_24, %c0_25] : memref<8x32xf32, #tpu.memory_space<vmem>>, vector<8x32xf32>
    tpu.vector_store %arg8[%c0_24, %c0_25], %42 {strides = array<i32>} : memref<8x32xf32, #tpu.memory_space<vmem>>, vector<8x32xf32>,
    return
  }
  func.func @transform_0(%arg0: i32) -> (i32, i32) {
    %c0_i32 = arith.constant 0 : i32
    %c0_i32_0 = arith.constant 0 : i32
    return %arg0, %c0_i32 : i32, i32
  }
  func.func @transform_1(%arg0: i32) -> (i32, i32) {
    %c0_i32 = arith.constant 0 : i32
    %c0_i32_0 = arith.constant 0 : i32
    %c0_i32_1 = arith.constant 0 : i32
    return %c0_i32, %c0_i32_0 : i32, i32
  }
  func.func @transform_2(%arg0: i32) -> (i32, i32) {
    %c0_i32 = arith.constant 0 : i32
    %c0_i32_0 = arith.constant 0 : i32
    %c0_i32_1 = arith.constant 0 : i32
    return %c0_i32, %c0_i32_0 : i32, i32
  }
  func.func @transform_3(%arg0: i32) -> (i32, i32) {
    %c0_i32 = arith.constant 0 : i32
    %c0_i32_0 = arith.constant 0 : i32
    %c0_i32_1 = arith.constant 0 : i32
    return %c0_i32, %c0_i32_0 : i32, i32
  }
  func.func @transform_4(%arg0: i32) -> (i32, i32) {
    %c0_i32 = arith.constant 0 : i32
    %c0_i32_0 = arith.constant 0 : i32
    %c0_i32_1 = arith.constant 0 : i32
    return %c0_i32, %c0_i32_0 : i32, i32
  }
  func.func @transform_5(%arg0: i32) -> (i32, i32) {
    %c0_i32 = arith.constant 0 : i32
    %c0_i32_0 = arith.constant 0 : i32
    %c0_i32_1 = arith.constant 0 : i32
    return %c0_i32, %c0_i32_0 : i32, i32
  }
  func.func @transform_6(%arg0: i32) -> (i32, i32) {
    %c0_i32 = arith.constant 0 : i32
    %c0_i32_0 = arith.constant 0 : i32
    %c0_i32_1 = arith.constant 0 : i32
    return %c0_i32, %c0_i32_0 : i32, i32
  }
  func.func @transform_7(%arg0: i32) -> (i32, i32) {
    %c0_i32 = arith.constant 0 : i32
    %c0_i32_0 = arith.constant 0 : i32
    return %arg0, %c0_i32 : i32, i32
  }
}

</mosaic_0001>

<llo_original>
// kernel: tpu_custom_call.1
$region0: #{tpu_custom_call.1}
  #allocation0 [shape = 'u32[]', space=smem, size = 0x4, offset = 0x4, fixed_abs, tag = 'smem constant byte address 0x4 - core index']
  #allocation1 [shape = 'u32[144,128]{1,0:T(1,128)}', space=vmem, size = 0x12000, scoped, tag = 'internal scratch']
  %s0 = inlined_call_operand.vmem [shape: f32[16,32], index: 0, kind: input, shape index: {}]
  %s1 = inlined_call_operand.vmem [shape: f32[1,32], index: 1, kind: input, shape index: {}]
  %s2 = inlined_call_operand.vmem [shape: f32[1,32], index: 2, kind: input, shape index: {}]
  %s3 = inlined_call_operand.vmem [shape: f32[32,8], index: 3, kind: input, shape index: {}]
  %s4 = inlined_call_operand.vmem [shape: f32[1,8], index: 4, kind: input, shape index: {}]
  %s5 = inlined_call_operand.vmem [shape: f32[8,32], index: 5, kind: input, shape index: {}]
  %s6 = inlined_call_operand.vmem [shape: f32[1,32], index: 6, kind: input, shape index: {}]
  %s7 = inlined_call_operand.hbm [shape: f32[16,32], index: 7, kind: output, shape index: {}]
  %s8 = sld [smem:[#allocation0]]
  $region61: #{tpu_custom_call.1} parent=0
    _
  %s10 = ssub.s32 1, %s8
  %s11 = scalar_select 0, %s10, %s8
  $region1: #{tpu_custom_call.1} parent=0
    #allocation2 [shape = 'u8[8192]{0}', space=vmem, size = 0x2000, scoped, tag = 'output window, operand 0']
    #allocation3 [shape = 's32[2]{0}', space=sflag, size = 0x8, scoped, tag = 'scoped memory for tpu_custom_call.1']
    %12 = vsyncpa [#allocation3], 0
    %s13 = scalar_lea.sflag [#allocation3], 1
    %14 = vsyncpa %s13, 0
    loop: start=0, step=1, limit=4
    $region2: #{tpu_custom_call.1} parent=1 // loop_pre_header
      _
    $region3: #{tpu_custom_call.1} parent=1 // loop_header
      %s16 = sphi 0, %s20
      %p17 = scmp.ge.s32.totalorder %s16, 4
      %s26 = sphi 0, %s28
      %s29 = sphi 0, %s26
      %s30 = sphi 0, %s29
      %s46 = sphi 0, %s30
      %s50 = sphi 0, %s50
      %s52 = sphi 0, %s50
      %s53 = sphi 0, %s52
      %s67 = sphi 0, %s53
      %s71 = sphi 0, %s71
      %s73 = sphi 0, %s71
      %s74 = sphi 0, %s73
      %s88 = sphi 0, %s74
      %s92 = sphi 0, %s92
      %s94 = sphi 0, %s92
      %s95 = sphi 0, %s94
      %s109 = sphi 0, %s95
      %s113 = sphi 0, %s113
      %s115 = sphi 0, %s113
      %s116 = sphi 0, %s115
      %s130 = sphi 0, %s116
      %s134 = sphi 0, %s134
      %s136 = sphi 0, %s134
      %s137 = sphi 0, %s136
      %s151 = sphi 0, %s137
      %s155 = sphi 0, %s155
      %s157 = sphi 0, %s155
      %s158 = sphi 0, %s157
      %s172 = sphi 0, %s158
      %s178 = sphi 0, %s180
      %s181 = sphi 0, %s178
      %s182 = sphi 0, %s181
      %s198 = sphi 0, %s182
    $region4: #{tpu_custom_call.1} parent=1 // loop_header_branch
      %19 = sbr.rel (%p17) target = $region8
    $region5: #{tpu_custom_call.1} parent=1 // loop_body
      %s21 = ssub.s32 %s16, 1
      %s22 = ssub.s32 %s16, 2
      %s23 = sadd.s32 %s16, 1
      %s24 = ssub.s32 %s16, %s23
      %p25 = scmp.eq.s32.totalorder %s24, 0
      %s27 = sadd.s32 %s26, 1
      %s28 = scalar_select %p25, %s26, %s27
      %p31 = pneg %p25
      %p32 = scmp.eq.s32.totalorder %s16, 1
      %p33 = por %p31, %p32
      %p34 = scmp.ne.s32.totalorder %s26, %s29
      %p35 = scmp.eq.s32.totalorder %s16, 0
      %p36 = por %p34, %p35
      %p37 = scmp.ne.s32.totalorder %s26, %s29
      %p38 = scmp.eq.s32.totalorder %s21, 1
      %p39 = por %p37, %p38
      %p40 = scmp.ne.s32.totalorder %s29, %s30
      %p41 = scmp.eq.s32.totalorder %s21, 0
      %p42 = por %p40, %p41
      %p43 = scmp.ne.s32.totalorder %s29, %s30
      %p44 = scmp.eq.s32.totalorder %s22, 1
      %p45 = por %p43, %p44
      %p47 = scmp.ne.s32.totalorder %s30, %s46
      %p48 = scmp.eq.s32.totalorder %s22, 0
      %p49 = por %p47, %p48
      %s51 = sadd.s32 %s50, 1
      %p54 = scmp.eq.s32.totalorder %s16, 1
      %p55 = scmp.ne.s32.totalorder %s50, %s52
      %p56 = scmp.eq.s32.totalorder %s16, 0
      %p57 = por %p55, %p56
      %p58 = scmp.ne.s32.totalorder %s50, %s52
      %p59 = scmp.eq.s32.totalorder %s21, 1
      %p60 = por %p58, %p59
      %p61 = scmp.ne.s32.totalorder %s52, %s53
      %p62 = scmp.eq.s32.totalorder %s21, 0
      %p63 = por %p61, %p62
      %p64 = scmp.ne.s32.totalorder %s52, %s53
      %p65 = scmp.eq.s32.totalorder %s22, 1
      %p66 = por %p64, %p65
      %p68 = scmp.ne.s32.totalorder %s53, %s67
      %p69 = scmp.eq.s32.totalorder %s22, 0
      %p70 = por %p68, %p69
      %s72 = sadd.s32 %s71, 1
      %p75 = scmp.eq.s32.totalorder %s16, 1
      %p76 = scmp.ne.s32.totalorder %s71, %s73
      %p77 = scmp.eq.s32.totalorder %s16, 0
      %p78 = por %p76, %p77
      %p79 = scmp.ne.s32.totalorder %s71, %s73
      %p80 = scmp.eq.s32.totalorder %s21, 1
      %p81 = por %p79, %p80
      %p82 = scmp.ne.s32.totalorder %s73, %s74
      %p83 = scmp.eq.s32.totalorder %s21, 0
      %p84 = por %p82, %p83
      %p85 = scmp.ne.s32.totalorder %s73, %s74
      %p86 = scmp.eq.s32.totalorder %s22, 1
      %p87 = por %p85, %p86
      %p89 = scmp.ne.s32.totalorder %s74, %s88
      %p90 = scmp.eq.s32.totalorder %s22, 0
      %p91 = por %p89, %p90
      %s93 = sadd.s32 %s92, 1
      %p96 = scmp.eq.s32.totalorder %s16, 1
      %p97 = scmp.ne.s32.totalorder %s92, %s94
      %p98 = scmp.eq.s32.totalorder %s16, 0
      %p99 = por %p97, %p98
      %p100 = scmp.ne.s32.totalorder %s92, %s94
      %p101 = scmp.eq.s32.totalorder %s21, 1
      %p102 = por %p100, %p101
      %p103 = scmp.ne.s32.totalorder %s94, %s95
      %p104 = scmp.eq.s32.totalorder %s21, 0
      %p105 = por %p103, %p104
      %p106 = scmp.ne.s32.totalorder %s94, %s95
      %p107 = scmp.eq.s32.totalorder %s22, 1
      %p108 = por %p106, %p107
      %p110 = scmp.ne.s32.totalorder %s95, %s109
      %p111 = scmp.eq.s32.totalorder %s22, 0
      %p112 = por %p110, %p111
      %s114 = sadd.s32 %s113, 1
      %p117 = scmp.eq.s32.totalorder %s16, 1
      %p118 = scmp.ne.s32.totalorder %s113, %s115
      %p119 = scmp.eq.s32.totalorder %s16, 0
      %p120 = por %p118, %p119
      %p121 = scmp.ne.s32.totalorder %s113, %s115
      %p122 = scmp.eq.s32.totalorder %s21, 1
      %p123 = por %p121, %p122
      %p124 = scmp.ne.s32.totalorder %s115, %s116
      %p125 = scmp.eq.s32.totalorder %s21, 0
      %p126 = por %p124, %p125
      %p127 = scmp.ne.s32.totalorder %s115, %s116
      %p128 = scmp.eq.s32.totalorder %s22, 1
      %p129 = por %p127, %p128
      %p131 = scmp.ne.s32.totalorder %s116, %s130
      %p132 = scmp.eq.s32.totalorder %s22, 0
      %p133 = por %p131, %p132
      %s135 = sadd.s32 %s134, 1
      %p138 = scmp.eq.s32.totalorder %s16, 1
      %p139 = scmp.ne.s32.totalorder %s134, %s136
      %p140 = scmp.eq.s32.totalorder %s16, 0
      %p141 = por %p139, %p140
      %p142 = scmp.ne.s32.totalorder %s134, %s136
      %p143 = scmp.eq.s32.totalorder %s21, 1
      %p144 = por %p142, %p143
      %p145 = scmp.ne.s32.totalorder %s136, %s137
      %p146 = scmp.eq.s32.totalorder %s21, 0
      %p147 = por %p145, %p146
      %p148 = scmp.ne.s32.totalorder %s136, %s137
      %p149 = scmp.eq.s32.totalorder %s22, 1
      %p150 = por %p148, %p149
      %p152 = scmp.ne.s32.totalorder %s137, %s151
      %p153 = scmp.eq.s32.totalorder %s22, 0
      %p154 = por %p152, %p153
      %s156 = sadd.s32 %s155, 1
      %p159 = scmp.eq.s32.totalorder %s16, 1
      %p160 = scmp.ne.s32.totalorder %s155, %s157
      %p161 = scmp.eq.s32.totalorder %s16, 0
      %p162 = por %p160, %p161
      %p163 = scmp.ne.s32.totalorder %s155, %s157
      %p164 = scmp.eq.s32.totalorder %s21, 1
      %p165 = por %p163, %p164
      %p166 = scmp.ne.s32.totalorder %s157, %s158
      %p167 = scmp.eq.s32.totalorder %s21, 0
      %p168 = por %p166, %p167
      %p169 = scmp.ne.s32.totalorder %s157, %s158
      %p170 = scmp.eq.s32.totalorder %s22, 1
      %p171 = por %p169, %p170
      %p173 = scmp.ne.s32.totalorder %s158, %s172
      %p174 = scmp.eq.s32.totalorder %s22, 0
      %p175 = por %p173, %p174
      %s176 = ssub.s32 %s16, %s23
      %p177 = scmp.eq.s32.totalorder %s176, 0
      %s179 = sadd.s32 %s178, 1
      %s180 = scalar_select %p177, %s178, %s179
      %p183 = pneg %p177
      %p184 = scmp.eq.s32.totalorder %s16, 1
      %p185 = por %p183, %p184
      %p186 = scmp.ne.s32.totalorder %s178, %s181
      %p187 = scmp.eq.s32.totalorder %s16, 0
      %p188 = por %p186, %p187
      %p189 = scmp.ne.s32.totalorder %s178, %s181
      %p190 = scmp.eq.s32.totalorder %s21, 1
      %p191 = por %p189, %p190
      %p192 = scmp.ne.s32.totalorder %s181, %s182
      %p193 = scmp.eq.s32.totalorder %s21, 0
      %p194 = por %p192, %p193
      %p195 = scmp.ne.s32.totalorder %s181, %s182
      %p196 = scmp.eq.s32.totalorder %s22, 1
      %p197 = por %p195, %p196
      %p199 = scmp.ne.s32.totalorder %s182, %s198
      %p200 = scmp.eq.s32.totalorder %s22, 0
      %p201 = por %p199, %p200
      %p202 = scmp.le.s32.totalorder 1, %s16
      %p203 = scmp.lt.s32.totalorder %s16, 3
      %p204 = pnand %p202, %p203
      %p205 = pneg %p204
      // Predicated region
      $region9: #{tpu_custom_call.1} parent=5 // pred_check
        _
      $region10: #{tpu_custom_call.1} parent=5 // pred_check_branch
        %207 = sbr.rel (%p204) target = $region12
      $region11: #{tpu_custom_call.1} parent=5 // pred_region
        %s208 = ssub.s32 %s16, 1
        // Predicated region
        $region13: #{tpu_custom_call.1} parent=11 // pred_check
          %p209 = pneg %p63
        $region14: #{tpu_custom_call.1} parent=11 // pred_check_branch
          %211 = sbr.rel (%p209) target = $region16
        $region15: #{tpu_custom_call.1} parent=11 // pred_region
          _
        $region16: #{tpu_custom_call.1} parent=11 // pred_fallthru
          _
        // Predicated region
        $region17: #{tpu_custom_call.1} parent=11 // pred_check
          %p212 = pneg %p84
        $region18: #{tpu_custom_call.1} parent=11 // pred_check_branch
          %214 = sbr.rel (%p212) target = $region20
        $region19: #{tpu_custom_call.1} parent=11 // pred_region
          _
        $region20: #{tpu_custom_call.1} parent=11 // pred_fallthru
          _
        // Predicated region
        $region21: #{tpu_custom_call.1} parent=11 // pred_check
          %p215 = pneg %p105
        $region22: #{tpu_custom_call.1} parent=11 // pred_check_branch
          %217 = sbr.rel (%p215) target = $region24
        $region23: #{tpu_custom_call.1} parent=11 // pred_region
          _
        $region24: #{tpu_custom_call.1} parent=11 // pred_fallthru
          _
        // Predicated region
        $region25: #{tpu_custom_call.1} parent=11 // pred_check
          %p218 = pneg %p126
        $region26: #{tpu_custom_call.1} parent=11 // pred_check_branch
          %220 = sbr.rel (%p218) target = $region28
        $region27: #{tpu_custom_call.1} parent=11 // pred_region
          _
        $region28: #{tpu_custom_call.1} parent=11 // pred_fallthru
          _
        // Predicated region
        $region29: #{tpu_custom_call.1} parent=11 // pred_check
          %p221 = pneg %p147
        $region30: #{tpu_custom_call.1} parent=11 // pred_check_branch
          %223 = sbr.rel (%p221) target = $region32
        $region31: #{tpu_custom_call.1} parent=11 // pred_region
          _
        $region32: #{tpu_custom_call.1} parent=11 // pred_fallthru
          _
        // Predicated region
        $region33: #{tpu_custom_call.1} parent=11 // pred_check
          %p224 = pneg %p168
        $region34: #{tpu_custom_call.1} parent=11 // pred_check_branch
          %226 = sbr.rel (%p224) target = $region36
        $region35: #{tpu_custom_call.1} parent=11 // pred_region
          _
        $region36: #{tpu_custom_call.1} parent=11 // pred_fallthru
          _
      $region12: #{tpu_custom_call.1} parent=5 // pred_fallthru
        _
      %p227 = scmp.lt.s32.totalorder %s16, 2
      // Predicated region
      $region37: #{tpu_custom_call.1} parent=5 // pred_check
        %p228 = pneg %p227
      $region38: #{tpu_custom_call.1} parent=5 // pred_check_branch
        %230 = sbr.rel (%p228) target = $region40
      $region39: #{tpu_custom_call.1} parent=5 // pred_region
        // Predicated region
        $region41: #{tpu_custom_call.1} parent=39 // pred_check
          %p231 = pneg %p36
        $region42: #{tpu_custom_call.1} parent=39 // pred_check_branch
          %233 = sbr.rel (%p231) target = $region44
        $region43: #{tpu_custom_call.1} parent=39 // pred_region
          %p234 = scmp.lt.s32.totalorder %s16, 1
          %s235 = scalar_select %p234, %s16, 1
          %s236 = smul.addr %s235, 8
          %s237 = scalar_lea.vmem %s0, %s236
        $region44: #{tpu_custom_call.1} parent=39 // pred_fallthru
          _
      $region40: #{tpu_custom_call.1} parent=5 // pred_fallthru
        _
      %p238 = scmp.le.s32.totalorder 1, %s16
      %p239 = scmp.lt.s32.totalorder %s16, 3
      %p240 = pnand %p238, %p239
      %p241 = pneg %p240
      // Predicated region
      $region45: #{tpu_custom_call.1} parent=5 // pred_check
        _
      $region46: #{tpu_custom_call.1} parent=5 // pred_check_branch
        %243 = sbr.rel (%p240) target = $region48
      $region47: #{tpu_custom_call.1} parent=5 // pred_region
        %s244 = ssub.s32 %s16, 1
        %p245 = scmp.lt.s32.totalorder %s21, 1
        %s246 = scalar_select %p245, %s21, 1
        %s247 = smul.addr %s246, 8
        %s248 = scalar_lea.vmem %s0, %s247
        %p249 = pneg %p42
        %p250 = pneg %p39
        %p251 = pneg %p63
        %p252 = pneg %p60
        %p253 = pneg %p84
        %p254 = pneg %p81
        %p255 = pneg %p105
        %p256 = pneg %p102
        %p257 = pneg %p126
        %p258 = pneg %p123
        %p259 = pneg %p147
        %p260 = pneg %p144
        %p261 = pneg %p168
        %p262 = pneg %p165
        %p263 = pneg %p194
        %p264 = pneg %p191
        %s265 = sand.u32 %s181, 1
        %s266 = scalar_lea.sflag [#allocation3], %s265
        %s267 = sand.u32 %s181, 1
        %s268 = smul.addr %s267, 8
        %s269 = scalar_lea.vmem [#allocation2], %s268
        %p270 = scmp.lt.s32.totalorder %s21, 1
        %s271 = scalar_select %p270, %s21, 1
        %s272 = smul.addr %s271, 8
        %s273 = scalar_lea.vmem %s0, %s272
        %v274 = vld [vmem:[%s273] sm:$0xff]
        %vm275 = vcmask 261120
        %v276 = vsel %vm275, %v274, 0.0
        %277 = vadd.xlane.f32.xlu0 %v276
        %v278 = vpop.xlane.xlu0 %277
        %v279 = vmul.f32 %v278, 0.03125
        %v280 = vsub.f32 %v274, %v279
        %v281 = vmul.f32 %v280, %v280
        %v282 = vsel %vm275, %v281, 0.0
        %283 = vadd.xlane.f32.xlu0 %v282
        %v284 = vpop.xlane.xlu0 %283
        %v285 = vmul.f32 %v284, 0.03125
        %v286 = vadd.f32 %v285, 1e-05
        %v287 = vrsqrt.pop %v286
        %v288 = vmul.f32 %v280, %v287
        %v289 = vld [vmem:[%s1] sm:$0x1]
        %v291 = vlaneseq
        %v292 = vshrl.u32 %v291, 7
        %v293 = vsub.s32 0, %v292
        %v294 = vrot.slane %v289, %v293
        %v296 = vmul.f32 %v288, %v294
        %v297 = vld [vmem:[%s2] sm:$0x1]
        %v299 = vlaneseq
        %v300 = vshrl.u32 %v299, 7
        %v301 = vsub.s32 0, %v300
        %v302 = vrot.slane %v297, %v301
        %v304 = vadd.f32 %v296, %v302
        %v305 = vld [vmem:[%s3] sm:$0xff]
        %v306 = vld [vmem:[%s3 + $0x8] sm:$0xff]
        %v307 = vld [vmem:[%s3 + $0x10] sm:$0xff]
        %v308 = vld [vmem:[%s3 + $0x18] sm:$0xff]
        %v309 = vld [vmem:[%s4] sm:$0x1]
        %v311 = vlaneseq
        %v312 = vshrl.u32 %v311, 7
        %v313 = vsub.s32 0, %v312
        %v314 = vrot.slane %v309, %v313
        %v317 = vsel %vm275, %v304, 0
        %319 = vmatprep.subr.mxu0 0.0
        %320 = vmatpush1.msra.mxu0 %v305
        %321 = vmatprep.subr.mxu0 0.0
        %322 = vmatpush1.msra.mxu0 %v306
        %323 = vmatprep.subr.mxu0 0.0
        %324 = vmatpush1.msra.mxu0 %v307
        %325 = vmatprep.subr.mxu0 0.0
        %326 = vmatpush1.msra.mxu0 %v308
        %327 = vmatprep.subr.mxu0 0.0
        %328 = vmatpush1.msra.mxu0 0.0
        %329 = vmatprep.subr.mxu0 0.0
        %330 = vmatpush1.msra.mxu0 0.0
        %331 = vmatprep.subr.mxu0 0.0
        %332 = vmatpush1.msra.mxu0 0.0
        %333 = vmatprep.subr.mxu0 0.0
        %334 = vmatpush1.msra.mxu0 0.0
        %335 = vmatprep.subr.mxu0 0.0
        %336 = vmatpush1.msra.mxu0 0.0
        %337 = vmatprep.subr.mxu0 0.0
        %338 = vmatpush1.msra.mxu0 0.0
        %339 = vmatprep.subr.mxu0 0.0
        %340 = vmatpush1.msra.mxu0 0.0
        %341 = vmatprep.subr.mxu0 0.0
        %342 = vmatpush1.msra.mxu0 0.0
        %343 = vmatprep.subr.mxu0 0.0
        %344 = vmatpush1.msra.mxu0 0.0
        %345 = vmatprep.subr.mxu0 0.0
        %346 = vmatpush1.msra.mxu0 0.0
        %347 = vmatprep.subr.mxu0 0.0
        %348 = vmatpush1.msra.mxu0 0.0
        %349 = vmatprep.subr.mxu0 0.0
        %350 = vmatpush1.msra.mxu0 0.0
        %351 = vmatprep.subr.mxu0 0.0
        %352 = vmatpush1.msra.mxu0 0.0
        %353 = vmatprep.subr.mxu0 0.0
        %354 = vmatpush1.msra.mxu0 0.0
        %355 = vmatprep.subr.mxu0 0.0
        %356 = vmatpush1.msra.mxu0 0.0
        %357 = vmatprep.subr.mxu0 0.0
        %358 = vmatpush1.msra.mxu0 0.0
        %359 = vmatprep.subr.mxu0 0.0
        %360 = vmatpush1.msra.mxu0 0.0
        %361 = vmatprep.subr.mxu0 0.0
        %362 = vmatpush1.msra.mxu0 0.0
        %363 = vmatprep.subr.mxu0 0.0
        %364 = vmatpush1.msra.mxu0 0.0
        %365 = vmatprep.subr.mxu0 0.0
        %366 = vmatpush1.msra.mxu0 0.0
        %367 = vmatprep.subr.mxu0 0.0
        %368 = vmatpush1.msra.mxu0 0.0
        %369 = vmatprep.subr.mxu0 0.0
        %370 = vmatpush1.msra.mxu0 0.0
        %371 = vmatprep.subr.mxu0 0.0
        %372 = vmatpush1.msra.mxu0 0.0
        %373 = vmatprep.subr.mxu0 0.0
        %374 = vmatpush1.msra.mxu0 0.0
        %375 = vmatprep.subr.mxu0 0.0
        %376 = vmatpush1.msra.mxu0 0.0
        %377 = vmatprep.subr.mxu0 0.0
        %378 = vmatpush1.msra.mxu0 0.0
        %379 = vmatprep.subr.mxu0 0.0
        %380 = vmatpush1.msra.mxu0 0.0
        %381 = vmatprep.subr.mxu0 0.0
        %382 = vmatpush1.msra.mxu0 0.0
        %383 = vmatprep.mubr.f32.mxu0 0.0
        %384 = vmatmul.mubr.f32.gmra.mrb[0].mxu0 %v317
        %v385 = vpop.f32.mrb[0].mxu0
        %v386 = vadd.f32 %v314, %v385
        %v387 = vpop.f32.mrb[0].mxu0
        %388 = vdwg.mxu0
        %v389 = vmul.f32 %v386, 0.5
        %v390 = vmul.f32 %v386, 0.70710677
        %v391 = verf.f32.pop %v390
        %v392 = vadd.f32 %v391, 1.0
        %v393 = vmul.f32 %v389, %v392
        %v394 = vld [vmem:[%s5] sm:$0xff]
        %v395 = vld [vmem:[%s6] sm:$0x1]
        %v397 = vlaneseq
        %v398 = vshrl.u32 %v397, 7
        %v399 = vsub.s32 0, %v398
        %v400 = vrot.slane %v395, %v399
        %vm402 = vcmask 64512
        %v404 = vsel %vm402, %v393, 0
        %406 = vmatprep.subr.mxu0 0.0
        %407 = vmatpush1.msra.mxu0 %v394
        %408 = vmatprep.subr.mxu0 0.0
        %409 = vmatpush1.msra.mxu0 0.0
        %410 = vmatprep.subr.mxu0 0.0
        %411 = vmatpush1.msra.mxu0 0.0
        %412 = vmatprep.subr.mxu0 0.0
        %413 = vmatpush1.msra.mxu0 0.0
        %414 = vmatprep.subr.mxu0 0.0
        %415 = vmatpush1.msra.mxu0 0.0
        %416 = vmatprep.subr.mxu0 0.0
        %417 = vmatpush1.msra.mxu0 0.0
        %418 = vmatprep.subr.mxu0 0.0
        %419 = vmatpush1.msra.mxu0 0.0
        %420 = vmatprep.subr.mxu0 0.0
        %421 = vmatpush1.msra.mxu0 0.0
        %422 = vmatprep.subr.mxu0 0.0
        %423 = vmatpush1.msra.mxu0 0.0
        %424 = vmatprep.subr.mxu0 0.0
        %425 = vmatpush1.msra.mxu0 0.0
        %426 = vmatprep.subr.mxu0 0.0
        %427 = vmatpush1.msra.mxu0 0.0
        %428 = vmatprep.subr.mxu0 0.0
        %429 = vmatpush1.msra.mxu0 0.0
        %430 = vmatprep.subr.mxu0 0.0
        %431 = vmatpush1.msra.mxu0 0.0
        %432 = vmatprep.subr.mxu0 0.0
        %433 = vmatpush1.msra.mxu0 0.0
        %434 = vmatprep.subr.mxu0 0.0
        %435 = vmatpush1.msra.mxu0 0.0
        %436 = vmatprep.subr.mxu0 0.0
        %437 = vmatpush1.msra.mxu0 0.0
        %438 = vmatprep.subr.mxu0 0.0
        %439 = vmatpush1.msra.mxu0 0.0
        %440 = vmatprep.subr.mxu0 0.0
        %441 = vmatpush1.msra.mxu0 0.0
        %442 = vmatprep.subr.mxu0 0.0
        %443 = vmatpush1.msra.mxu0 0.0
        %444 = vmatprep.subr.mxu0 0.0
        %445 = vmatpush1.msra.mxu0 0.0
        %446 = vmatprep.subr.mxu0 0.0
        %447 = vmatpush1.msra.mxu0 0.0
        %448 = vmatprep.subr.mxu0 0.0
        %449 = vmatpush1.msra.mxu0 0.0
        %450 = vmatprep.subr.mxu0 0.0
        %451 = vmatpush1.msra.mxu0 0.0
        %452 = vmatprep.subr.mxu0 0.0
        %453 = vmatpush1.msra.mxu0 0.0
        %454 = vmatprep.subr.mxu0 0.0
        %455 = vmatpush1.msra.mxu0 0.0
        %456 = vmatprep.subr.mxu0 0.0
        %457 = vmatpush1.msra.mxu0 0.0
        %458 = vmatprep.subr.mxu0 0.0
        %459 = vmatpush1.msra.mxu0 0.0
        %460 = vmatprep.subr.mxu0 0.0
        %461 = vmatpush1.msra.mxu0 0.0
        %462 = vmatprep.subr.mxu0 0.0
        %463 = vmatpush1.msra.mxu0 0.0
        %464 = vmatprep.subr.mxu0 0.0
        %465 = vmatpush1.msra.mxu0 0.0
        %466 = vmatprep.subr.mxu0 0.0
        %467 = vmatpush1.msra.mxu0 0.0
        %468 = vmatprep.subr.mxu0 0.0
        %469 = vmatpush1.msra.mxu0 0.0
        %470 = vmatprep.mubr.f32.mxu0 0.0
        %471 = vmatmul.mubr.f32.gmra.mrb[0].mxu0 %v404
        %v472 = vpop.f32.mrb[0].mxu0
        %v473 = vadd.f32 %v400, %v472
        %v474 = vpop.f32.mrb[0].mxu0
        %475 = vdwg.mxu0
        %v476 = vadd.f32 %v473, %v274
        %477 = vst.msk [vmem:[%s269] sm:$0xff] %vm275, %v476
        %s478 = sand.u32 %s181, 1
        %s479 = scalar_lea.sflag [#allocation3], %s478
        %s480 = sand.u32 %s181, 1
        %s481 = smul.addr %s480, 8
        %s482 = scalar_lea.vmem [#allocation2], %s481
        // Predicated region
        $region49: #{tpu_custom_call.1} parent=47 // pred_check
          %p483 = pneg %p191
        $region50: #{tpu_custom_call.1} parent=47 // pred_check_branch
          %485 = sbr.rel (%p483) target = $region52
        $region51: #{tpu_custom_call.1} parent=47 // pred_region
          %s487 = ssub.s32 128, 128
          %488 = vsyncadd %s479, %s487
          %s489 = smul.addr %s21, 128
          %s490 = scalar_lea.hbm %s7, %s489
          %s492 = sshll.u32 %s482, 4
          %s493 = int_to_ptr.vmem [resolvable:$true] %s492
          %495 = dma.vmem_to_hbm [thread:$0]  %s493, 128, %s490, %s479
        $region52: #{tpu_custom_call.1} parent=47 // pred_fallthru
          _
      $region48: #{tpu_custom_call.1} parent=5 // pred_fallthru
        _
      %p496 = scmp.le.s32.totalorder 2, %s16
      // Predicated region
      $region53: #{tpu_custom_call.1} parent=5 // pred_check
        %p497 = pneg %p496
      $region54: #{tpu_custom_call.1} parent=5 // pred_check_branch
        %499 = sbr.rel (%p497) target = $region56
      $region55: #{tpu_custom_call.1} parent=5 // pred_region
        %s500 = ssub.s32 %s16, 2
        // Predicated region
        $region57: #{tpu_custom_call.1} parent=55 // pred_check
          %p501 = pneg %p197
        $region58: #{tpu_custom_call.1} parent=55 // pred_check_branch
          %503 = sbr.rel (%p501) target = $region60
        $region59: #{tpu_custom_call.1} parent=55 // pred_region
          %s504 = sand.u32 %s182, 1
          %s505 = scalar_lea.sflag [#allocation3], %s504
          %s506 = sand.u32 %s182, 1
          %s507 = smul.addr %s506, 8
          %s508 = scalar_lea.vmem [#allocation2], %s507
          %509 = dma.done %s505, 128
        $region60: #{tpu_custom_call.1} parent=55 // pred_fallthru
          _
      $region56: #{tpu_custom_call.1} parent=5 // pred_fallthru
        _
    $region6: #{tpu_custom_call.1} parent=1 // loop_footer
      %s20 = sadd.s32 1, %s16
    $region7: #{tpu_custom_call.1} parent=1 // loop_footer_branch
      %15 = sbr.rel target = $region3
    $region8: #{tpu_custom_call.1} parent=1 // loop_exit
      _
    %510 = vsyncpa [#allocation3], 1
    %s511 = scalar_lea.sflag [#allocation3], 1
    %512 = vsyncpa %s511, 1

// kernel: tpu_custom_call.1
$region0: #{tpu_custom_call.1}
  #allocation0 [shape = 'u32[]', space=smem, size = 0x4, offset = 0x4, fixed_abs, tag = 'smem constant byte address 0x4 - core index']
  #allocation1 [shape = 'u32[144,128]{1,0:T(1,128)}', space=vmem, size = 0x12000, scoped, tag = 'internal scratch']
  %s0 = inlined_call_operand.vmem [shape: f32[16,32], index: 0, kind: input, shape index: {}]
  %s1 = inlined_call_operand.vmem [shape: f32[1,32], index: 1, kind: input, shape index: {}]
  %s2 = inlined_call_operand.vmem [shape: f32[1,32], index: 2, kind: input, shape index: {}]
  %s3 = inlined_call_operand.vmem [shape: f32[32,8], index: 3, kind: input, shape index: {}]
  %s4 = inlined_call_operand.vmem [shape: f32[1,8], index: 4, kind: input, shape index: {}]
  %s5 = inlined_call_operand.vmem [shape: f32[8,32], index: 5, kind: input, shape index: {}]
  %s6 = inlined_call_operand.vmem [shape: f32[1,32], index: 6, kind: input, shape index: {}]
  %s7 = inlined_call_operand.hbm [shape: f32[16,32], index: 7, kind: output, shape index: {}]
  %s8 = sld [smem:[#allocation0]]
  $region61: #{tpu_custom_call.1} parent=0
    _
  %s10 = ssub.s32 1, %s8
  %s11 = scalar_select 0, %s10, %s8
  $region1: #{tpu_custom_call.1} parent=0
    #allocation2 [shape = 'u8[8192]{0}', space=vmem, size = 0x2000, scoped, tag = 'output window, operand 0']
    #allocation3 [shape = 's32[2]{0}', space=sflag, size = 0x8, scoped, tag = 'scoped memory for tpu_custom_call.1']
    %12 = vsyncpa [#allocation3], 0
    %s13 = scalar_lea.sflag [#allocation3], 1
    %14 = vsyncpa %s13, 0
    loop: start=0, step=1, limit=4
    $region2: #{tpu_custom_call.1} parent=1 // loop_pre_header
      _
    $region3: #{tpu_custom_call.1} parent=1 // loop_header
      %s16 = sphi 0, %s20
      %p17 = scmp.ge.s32.totalorder %s16, 4
      %s26 = sphi 0, %s28
      %s29 = sphi 0, %s26
      %s30 = sphi 0, %s29
      %s46 = sphi 0, %s30
      %s50 = sphi 0, %s50
      %s52 = sphi 0, %s50
      %s53 = sphi 0, %s52
      %s67 = sphi 0, %s53
      %s71 = sphi 0, %s71
      %s73 = sphi 0, %s71
      %s74 = sphi 0, %s73
      %s88 = sphi 0, %s74
      %s92 = sphi 0, %s92
      %s94 = sphi 0, %s92
      %s95 = sphi 0, %s94
      %s109 = sphi 0, %s95
      %s113 = sphi 0, %s113
      %s115 = sphi 0, %s113
      %s116 = sphi 0, %s115
      %s130 = sphi 0, %s116
      %s134 = sphi 0, %s134
      %s136 = sphi 0, %s134
      %s137 = sphi 0, %s136
      %s151 = sphi 0, %s137
      %s155 = sphi 0, %s155
      %s157 = sphi 0, %s155
      %s158 = sphi 0, %s157
      %s172 = sphi 0, %s158
      %s178 = sphi 0, %s180
      %s181 = sphi 0, %s178
      %s182 = sphi 0, %s181
      %s198 = sphi 0, %s182
    $region4: #{tpu_custom_call.1} parent=1 // loop_header_branch
      %19 = sbr.rel (%p17) target = $region8
    $region5: #{tpu_custom_call.1} parent=1 // loop_body
      %s21 = ssub.s32 %s16, 1
      %s22 = ssub.s32 %s16, 2
      %s23 = sadd.s32 %s16, 1
      %s24 = ssub.s32 %s16, %s23
      %p25 = scmp.eq.s32.totalorder %s24, 0
      %s27 = sadd.s32 %s26, 1
      %s28 = scalar_select %p25, %s26, %s27
      %p31 = pneg %p25
      %p32 = scmp.eq.s32.totalorder %s16, 1
      %p33 = por %p31, %p32
      %p34 = scmp.ne.s32.totalorder %s26, %s29
      %p35 = scmp.eq.s32.totalorder %s16, 0
      %p36 = por %p34, %p35
      %p37 = scmp.ne.s32.totalorder %s26, %s29
      %p38 = scmp.eq.s32.totalorder %s21, 1
      %p39 = por %p37, %p38
      %p40 = scmp.ne.s32.totalorder %s29, %s30
      %p41 = scmp.eq.s32.totalorder %s21, 0
      %p42 = por %p40, %p41
      %p43 = scmp.ne.s32.totalorder %s29, %s30
      %p44 = scmp.eq.s32.totalorder %s22, 1
      %p45 = por %p43, %p44
      %p47 = scmp.ne.s32.totalorder %s30, %s46
      %p48 = scmp.eq.s32.totalorder %s22, 0
      %p49 = por %p47, %p48
      %s51 = sadd.s32 %s50, 1
      %p54 = scmp.eq.s32.totalorder %s16, 1
      %p55 = scmp.ne.s32.totalorder %s50, %s52
      %p56 = scmp.eq.s32.totalorder %s16, 0
      %p57 = por %p55, %p56
      %p58 = scmp.ne.s32.totalorder %s50, %s52
      %p59 = scmp.eq.s32.totalorder %s21, 1
      %p60 = por %p58, %p59
      %p61 = scmp.ne.s32.totalorder %s52, %s53
      %p62 = scmp.eq.s32.totalorder %s21, 0
      %p63 = por %p61, %p62
      %p64 = scmp.ne.s32.totalorder %s52, %s53
      %p65 = scmp.eq.s32.totalorder %s22, 1
      %p66 = por %p64, %p65
      %p68 = scmp.ne.s32.totalorder %s53, %s67
      %p69 = scmp.eq.s32.totalorder %s22, 0
      %p70 = por %p68, %p69
      %s72 = sadd.s32 %s71, 1
      %p75 = scmp.eq.s32.totalorder %s16, 1
      %p76 = scmp.ne.s32.totalorder %s71, %s73
      %p77 = scmp.eq.s32.totalorder %s16, 0
      %p78 = por %p76, %p77
      %p79 = scmp.ne.s32.totalorder %s71, %s73
      %p80 = scmp.eq.s32.totalorder %s21, 1
      %p81 = por %p79, %p80
      %p82 = scmp.ne.s32.totalorder %s73, %s74
      %p83 = scmp.eq.s32.totalorder %s21, 0
      %p84 = por %p82, %p83
      %p85 = scmp.ne.s32.totalorder %s73, %s74
      %p86 = scmp.eq.s32.totalorder %s22, 1
      %p87 = por %p85, %p86
      %p89 = scmp.ne.s32.totalorder %s74, %s88
      %p90 = scmp.eq.s32.totalorder %s22, 0
      %p91 = por %p89, %p90
      %s93 = sadd.s32 %s92, 1
      %p96 = scmp.eq.s32.totalorder %s16, 1
      %p97 = scmp.ne.s32.totalorder %s92, %s94
      %p98 = scmp.eq.s32.totalorder %s16, 0
      %p99 = por %p97, %p98
      %p100 = scmp.ne.s32.totalorder %s92, %s94
      %p101 = scmp.eq.s32.totalorder %s21, 1
      %p102 = por %p100, %p101
      %p103 = scmp.ne.s32.totalorder %s94, %s95
      %p104 = scmp.eq.s32.totalorder %s21, 0
      %p105 = por %p103, %p104
      %p106 = scmp.ne.s32.totalorder %s94, %s95
      %p107 = scmp.eq.s32.totalorder %s22, 1
      %p108 = por %p106, %p107
      %p110 = scmp.ne.s32.totalorder %s95, %s109
      %p111 = scmp.eq.s32.totalorder %s22, 0
      %p112 = por %p110, %p111
      %s114 = sadd.s32 %s113, 1
      %p117 = scmp.eq.s32.totalorder %s16, 1
      %p118 = scmp.ne.s32.totalorder %s113, %s115
      %p119 = scmp.eq.s32.totalorder %s16, 0
      %p120 = por %p118, %p119
      %p121 = scmp.ne.s32.totalorder %s113, %s115
      %p122 = scmp.eq.s32.totalorder %s21, 1
      %p123 = por %p121, %p122
      %p124 = scmp.ne.s32.totalorder %s115, %s116
      %p125 = scmp.eq.s32.totalorder %s21, 0
      %p126 = por %p124, %p125
      %p127 = scmp.ne.s32.totalorder %s115, %s116
      %p128 = scmp.eq.s32.totalorder %s22, 1
      %p129 = por %p127, %p128
      %p131 = scmp.ne.s32.totalorder %s116, %s130
      %p132 = scmp.eq.s32.totalorder %s22, 0
      %p133 = por %p131, %p132
      %s135 = sadd.s32 %s134, 1
      %p138 = scmp.eq.s32.totalorder %s16, 1
      %p139 = scmp.ne.s32.totalorder %s134, %s136
      %p140 = scmp.eq.s32.totalorder %s16, 0
      %p141 = por %p139, %p140
      %p142 = scmp.ne.s32.totalorder %s134, %s136
      %p143 = scmp.eq.s32.totalorder %s21, 1
      %p144 = por %p142, %p143
      %p145 = scmp.ne.s32.totalorder %s136, %s137
      %p146 = scmp.eq.s32.totalorder %s21, 0
      %p147 = por %p145, %p146
      %p148 = scmp.ne.s32.totalorder %s136, %s137
      %p149 = scmp.eq.s32.totalorder %s22, 1
      %p150 = por %p148, %p149
      %p152 = scmp.ne.s32.totalorder %s137, %s151
      %p153 = scmp.eq.s32.totalorder %s22, 0
      %p154 = por %p152, %p153
      %s156 = sadd.s32 %s155, 1
      %p159 = scmp.eq.s32.totalorder %s16, 1
      %p160 = scmp.ne.s32.totalorder %s155, %s157
      %p161 = scmp.eq.s32.totalorder %s16, 0
      %p162 = por %p160, %p161
      %p163 = scmp.ne.s32.totalorder %s155, %s157
      %p164 = scmp.eq.s32.totalorder %s21, 1
      %p165 = por %p163, %p164
      %p166 = scmp.ne.s32.totalorder %s157, %s158
      %p167 = scmp.eq.s32.totalorder %s21, 0
      %p168 = por %p166, %p167
      %p169 = scmp.ne.s32.totalorder %s157, %s158
      %p170 = scmp.eq.s32.totalorder %s22, 1
      %p171 = por %p169, %p170
      %p173 = scmp.ne.s32.totalorder %s158, %s172
      %p174 = scmp.eq.s32.totalorder %s22, 0
      %p175 = por %p173, %p174
      %s176 = ssub.s32 %s16, %s23
      %p177 = scmp.eq.s32.totalorder %s176, 0
      %s179 = sadd.s32 %s178, 1
      %s180 = scalar_select %p177, %s178, %s179
      %p183 = pneg %p177
      %p184 = scmp.eq.s32.totalorder %s16, 1
      %p185 = por %p183, %p184
      %p186 = scmp.ne.s32.totalorder %s178, %s181
      %p187 = scmp.eq.s32.totalorder %s16, 0
      %p188 = por %p186, %p187
      %p189 = scmp.ne.s32.totalorder %s178, %s181
      %p190 = scmp.eq.s32.totalorder %s21, 1
      %p191 = por %p189, %p190
      %p192 = scmp.ne.s32.totalorder %s181, %s182
      %p193 = scmp.eq.s32.totalorder %s21, 0
      %p194 = por %p192, %p193
      %p195 = scmp.ne.s32.totalorder %s181, %s182
      %p196 = scmp.eq.s32.totalorder %s22, 1
      %p197 = por %p195, %p196
      %p199 = scmp.ne.s32.totalorder %s182, %s198
      %p200 = scmp.eq.s32.totalorder %s22, 0
      %p201 = por %p199, %p200
      %p202 = scmp.le.s32.totalorder 1, %s16
      %p203 = scmp.lt.s32.totalorder %s16, 3
      %p204 = pnand %p202, %p203
      %p205 = pneg %p204
      // Predicated region
      $region9: #{tpu_custom_call.1} parent=5 // pred_check
        _
      $region10: #{tpu_custom_call.1} parent=5 // pred_check_branch
        %207 = sbr.rel (%p204) target = $region12
      $region11: #{tpu_custom_call.1} parent=5 // pred_region
        %s208 = ssub.s32 %s16, 1
        // Predicated region
        $region13: #{tpu_custom_call.1} parent=11 // pred_check
          %p209 = pneg %p63
        $region14: #{tpu_custom_call.1} parent=11 // pred_check_branch
          %211 = sbr.rel (%p209) target = $region16
        $region15: #{tpu_custom_call.1} parent=11 // pred_region
          _
        $region16: #{tpu_custom_call.1} parent=11 // pred_fallthru
          _
        // Predicated region
        $region17: #{tpu_custom_call.1} parent=11 // pred_check
          %p212 = pneg %p84
        $region18: #{tpu_custom_call.1} parent=11 // pred_check_branch
          %214 = sbr.rel (%p212) target = $region20
        $region19: #{tpu_custom_call.1} parent=11 // pred_region
          _
        $region20: #{tpu_custom_call.1} parent=11 // pred_fallthru
          _
        // Predicated region
        $region21: #{tpu_custom_call.1} parent=11 // pred_check
          %p215 = pneg %p105
        $region22: #{tpu_custom_call.1} parent=11 // pred_check_branch
          %217 = sbr.rel (%p215) target = $region24
        $region23: #{tpu_custom_call.1} parent=11 // pred_region
          _
        $region24: #{tpu_custom_call.1} parent=11 // pred_fallthru
          _
        // Predicated region
        $region25: #{tpu_custom_call.1} parent=11 // pred_check
          %p218 = pneg %p126
        $region26: #{tpu_custom_call.1} parent=11 // pred_check_branch
          %220 = sbr.rel (%p218) target = $region28
        $region27: #{tpu_custom_call.1} parent=11 // pred_region
          _
        $region28: #{tpu_custom_call.1} parent=11 // pred_fallthru
          _
        // Predicated region
        $region29: #{tpu_custom_call.1} parent=11 // pred_check
          %p221 = pneg %p147
        $region30: #{tpu_custom_call.1} parent=11 // pred_check_branch
          %223 = sbr.rel (%p221) target = $region32
        $region31: #{tpu_custom_call.1} parent=11 // pred_region
          _
        $region32: #{tpu_custom_call.1} parent=11 // pred_fallthru
          _
        // Predicated region
        $region33: #{tpu_custom_call.1} parent=11 // pred_check
          %p224 = pneg %p168
        $region34: #{tpu_custom_call.1} parent=11 // pred_check_branch
          %226 = sbr.rel (%p224) target = $region36
        $region35: #{tpu_custom_call.1} parent=11 // pred_region
          _
        $region36: #{tpu_custom_call.1} parent=11 // pred_fallthru
          _
      $region12: #{tpu_custom_call.1} parent=5 // pred_fallthru
        _
      %p227 = scmp.lt.s32.totalorder %s16, 2
      // Predicated region
      $region37: #{tpu_custom_call.1} parent=5 // pred_check
        %p228 = pneg %p227
      $region38: #{tpu_custom_call.1} parent=5 // pred_check_branch
        %230 = sbr.rel (%p228) target = $region40
      $region39: #{tpu_custom_call.1} parent=5 // pred_region
        // Predicated region
        $region41: #{tpu_custom_call.1} parent=39 // pred_check
          %p231 = pneg %p36
        $region42: #{tpu_custom_call.1} parent=39 // pred_check_branch
          %233 = sbr.rel (%p231) target = $region44
        $region43: #{tpu_custom_call.1} parent=39 // pred_region
          %p234 = scmp.lt.s32.totalorder %s16, 1
          %s235 = scalar_select %p234, %s16, 1
          %s236 = smul.addr %s235, 8
          %s237 = scalar_lea.vmem %s0, %s236
        $region44: #{tpu_custom_call.1} parent=39 // pred_fallthru
          _
      $region40: #{tpu_custom_call.1} parent=5 // pred_fallthru
        _
      %p238 = scmp.le.s32.totalorder 1, %s16
      %p239 = scmp.lt.s32.totalorder %s16, 3
      %p240 = pnand %p238, %p239
      %p241 = pneg %p240
      // Predicated region
      $region45: #{tpu_custom_call.1} parent=5 // pred_check
        _
      $region46: #{tpu_custom_call.1} parent=5 // pred_check_branch
        %243 = sbr.rel (%p240) target = $region48
      $region47: #{tpu_custom_call.1} parent=5 // pred_region
        %s244 = ssub.s32 %s16, 1
        %p245 = scmp.lt.s32.totalorder %s21, 1
        %s246 = scalar_select %p245, %s21, 1
        %s247 = smul.addr %s246, 8
        %s248 = scalar_lea.vmem %s0, %s247
        %p249 = pneg %p42
        %p250 = pneg %p39
        %p251 = pneg %p63
        %p252 = pneg %p60
        %p253 = pneg %p84
        %p254 = pneg %p81
        %p255 = pneg %p105
        %p256 = pneg %p102
        %p257 = pneg %p126
        %p258 = pneg %p123
        %p259 = pneg %p147
        %p260 = pneg %p144
        %p261 = pneg %p168
        %p262 = pneg %p165
        %p263 = pneg %p194
        %p264 = pneg %p191
        %s265 = sand.u32 %s181, 1
        %s266 = scalar_lea.sflag [#allocation3], %s265
        %s267 = sand.u32 %s181, 1
        %s268 = smul.addr %s267, 8
        %s269 = scalar_lea.vmem [#allocation2], %s268
        %p270 = scmp.lt.s32.totalorder %s21, 1
        %s271 = scalar_select %p270, %s21, 1
        %s272 = smul.addr %s271, 8
        %s273 = scalar_lea.vmem %s0, %s272
        %v274 = vld [vmem:[%s273] sm:$0xff]
        %vm275 = vcmask 261120
        %v276 = vsel %vm275, %v274, 0.0
        %277 = vadd.xlane.f32.xlu0 %v276
        %v278 = vpop.xlane.xlu0 %277
        %v279 = vmul.f32 %v278, 0.03125
        %v280 = vsub.f32 %v274, %v279
        %v281 = vmul.f32 %v280, %v280
        %v282 = vsel %vm275, %v281, 0.0
        %283 = vadd.xlane.f32.xlu0 %v282
        %v284 = vpop.xlane.xlu0 %283
        %v285 = vmul.f32 %v284, 0.03125
        %v286 = vadd.f32 %v285, 1e-05
        %v287 = vrsqrt.pop %v286
        %v288 = vmul.f32 %v280, %v287
        %v289 = vld [vmem:[%s1] sm:$0x1]
        %v291 = vlaneseq
        %v292 = vshrl.u32 %v291, 7
        %v293 = vsub.s32 0, %v292
        %v294 = vrot.slane %v289, %v293
        %v296 = vmul.f32 %v288, %v294
        %v297 = vld [vmem:[%s2] sm:$0x1]
        %v299 = vlaneseq
        %v300 = vshrl.u32 %v299, 7
        %v301 = vsub.s32 0, %v300
        %v302 = vrot.slane %v297, %v301
        %v304 = vadd.f32 %v296, %v302
        %v305 = vld [vmem:[%s3] sm:$0xff]
        %v306 = vld [vmem:[%s3 + $0x8] sm:$0xff]
        %v307 = vld [vmem:[%s3 + $0x10] sm:$0xff]
        %v308 = vld [vmem:[%s3 + $0x18] sm:$0xff]
        %v309 = vld [vmem:[%s4] sm:$0x1]
        %v311 = vlaneseq
        %v312 = vshrl.u32 %v311, 7
        %v313 = vsub.s32 0, %v312
        %v314 = vrot.slane %v309, %v313
        %v317 = vsel %vm275, %v304, 0
        %319 = vmatprep.subr.mxu0 0.0
        %320 = vmatpush1.msra.mxu0 %v305
        %321 = vmatprep.subr.mxu0 0.0
        %322 = vmatpush1.msra.mxu0 %v306
        %323 = vmatprep.subr.mxu0 0.0
        %324 = vmatpush1.msra.mxu0 %v307
        %325 = vmatprep.subr.mxu0 0.0
        %326 = vmatpush1.msra.mxu0 %v308
        %327 = vmatprep.subr.mxu0 0.0
        %328 = vmatpush1.msra.mxu0 0.0
        %329 = vmatprep.subr.mxu0 0.0
        %330 = vmatpush1.msra.mxu0 0.0
        %331 = vmatprep.subr.mxu0 0.0
        %332 = vmatpush1.msra.mxu0 0.0
        %333 = vmatprep.subr.mxu0 0.0
        %334 = vmatpush1.msra.mxu0 0.0
        %335 = vmatprep.subr.mxu0 0.0
        %336 = vmatpush1.msra.mxu0 0.0
        %337 = vmatprep.subr.mxu0 0.0
        %338 = vmatpush1.msra.mxu0 0.0
        %339 = vmatprep.subr.mxu0 0.0
        %340 = vmatpush1.msra.mxu0 0.0
        %341 = vmatprep.subr.mxu0 0.0
        %342 = vmatpush1.msra.mxu0 0.0
        %343 = vmatprep.subr.mxu0 0.0
        %344 = vmatpush1.msra.mxu0 0.0
        %345 = vmatprep.subr.mxu0 0.0
        %346 = vmatpush1.msra.mxu0 0.0
        %347 = vmatprep.subr.mxu0 0.0
        %348 = vmatpush1.msra.mxu0 0.0
        %349 = vmatprep.subr.mxu0 0.0
        %350 = vmatpush1.msra.mxu0 0.0
        %351 = vmatprep.subr.mxu0 0.0
        %352 = vmatpush1.msra.mxu0 0.0
        %353 = vmatprep.subr.mxu0 0.0
        %354 = vmatpush1.msra.mxu0 0.0
        %355 = vmatprep.subr.mxu0 0.0
        %356 = vmatpush1.msra.mxu0 0.0
        %357 = vmatprep.subr.mxu0 0.0
        %358 = vmatpush1.msra.mxu0 0.0
        %359 = vmatprep.subr.mxu0 0.0
        %360 = vmatpush1.msra.mxu0 0.0
        %361 = vmatprep.subr.mxu0 0.0
        %362 = vmatpush1.msra.mxu0 0.0
        %363 = vmatprep.subr.mxu0 0.0
        %364 = vmatpush1.msra.mxu0 0.0
        %365 = vmatprep.subr.mxu0 0.0
        %366 = vmatpush1.msra.mxu0 0.0
        %367 = vmatprep.subr.mxu0 0.0
        %368 = vmatpush1.msra.mxu0 0.0
        %369 = vmatprep.subr.mxu0 0.0
        %370 = vmatpush1.msra.mxu0 0.0
        %371 = vmatprep.subr.mxu0 0.0
        %372 = vmatpush1.msra.mxu0 0.0
        %373 = vmatprep.subr.mxu0 0.0
        %374 = vmatpush1.msra.mxu0 0.0
        %375 = vmatprep.subr.mxu0 0.0
        %376 = vmatpush1.msra.mxu0 0.0
        %377 = vmatprep.subr.mxu0 0.0
        %378 = vmatpush1.msra.mxu0 0.0
        %379 = vmatprep.subr.mxu0 0.0
        %380 = vmatpush1.msra.mxu0 0.0
        %381 = vmatprep.subr.mxu0 0.0
        %382 = vmatpush1.msra.mxu0 0.0
        %383 = vmatprep.mubr.f32.mxu0 0.0
        %384 = vmatmul.mubr.f32.gmra.mrb[0].mxu0 %v317
        %v385 = vpop.f32.mrb[0].mxu0
        %v386 = vadd.f32 %v314, %v385
        %v387 = vpop.f32.mrb[0].mxu0
        %388 = vdwg.mxu0
        %v389 = vmul.f32 %v386, 0.5
        %v390 = vmul.f32 %v386, 0.70710677
        %v391 = verf.f32.pop %v390
        %v392 = vadd.f32 %v391, 1.0
        %v393 = vmul.f32 %v389, %v392
        %v394 = vld [vmem:[%s5] sm:$0xff]
        %v395 = vld [vmem:[%s6] sm:$0x1]
        %v397 = vlaneseq
        %v398 = vshrl.u32 %v397, 7
        %v399 = vsub.s32 0, %v398
        %v400 = vrot.slane %v395, %v399
        %vm402 = vcmask 64512
        %v404 = vsel %vm402, %v393, 0
        %406 = vmatprep.subr.mxu0 0.0
        %407 = vmatpush1.msra.mxu0 %v394
        %408 = vmatprep.subr.mxu0 0.0
        %409 = vmatpush1.msra.mxu0 0.0
        %410 = vmatprep.subr.mxu0 0.0
        %411 = vmatpush1.msra.mxu0 0.0
        %412 = vmatprep.subr.mxu0 0.0
        %413 = vmatpush1.msra.mxu0 0.0
        %414 = vmatprep.subr.mxu0 0.0
        %415 = vmatpush1.msra.mxu0 0.0
        %416 = vmatprep.subr.mxu0 0.0
        %417 = vmatpush1.msra.mxu0 0.0
        %418 = vmatprep.subr.mxu0 0.0
        %419 = vmatpush1.msra.mxu0 0.0
        %420 = vmatprep.subr.mxu0 0.0
        %421 = vmatpush1.msra.mxu0 0.0
        %422 = vmatprep.subr.mxu0 0.0
        %423 = vmatpush1.msra.mxu0 0.0
        %424 = vmatprep.subr.mxu0 0.0
        %425 = vmatpush1.msra.mxu0 0.0
        %426 = vmatprep.subr.mxu0 0.0
        %427 = vmatpush1.msra.mxu0 0.0
        %428 = vmatprep.subr.mxu0 0.0
        %429 = vmatpush1.msra.mxu0 0.0
        %430 = vmatprep.subr.mxu0 0.0
        %431 = vmatpush1.msra.mxu0 0.0
        %432 = vmatprep.subr.mxu0 0.0
        %433 = vmatpush1.msra.mxu0 0.0
        %434 = vmatprep.subr.mxu0 0.0
        %435 = vmatpush1.msra.mxu0 0.0
        %436 = vmatprep.subr.mxu0 0.0
        %437 = vmatpush1.msra.mxu0 0.0
        %438 = vmatprep.subr.mxu0 0.0
        %439 = vmatpush1.msra.mxu0 0.0
        %440 = vmatprep.subr.mxu0 0.0
        %441 = vmatpush1.msra.mxu0 0.0
        %442 = vmatprep.subr.mxu0 0.0
        %443 = vmatpush1.msra.mxu0 0.0
        %444 = vmatprep.subr.mxu0 0.0
        %445 = vmatpush1.msra.mxu0 0.0
        %446 = vmatprep.subr.mxu0 0.0
        %447 = vmatpush1.msra.mxu0 0.0
        %448 = vmatprep.subr.mxu0 0.0
        %449 = vmatpush1.msra.mxu0 0.0
        %450 = vmatprep.subr.mxu0 0.0
        %451 = vmatpush1.msra.mxu0 0.0
        %452 = vmatprep.subr.mxu0 0.0
        %453 = vmatpush1.msra.mxu0 0.0
        %454 = vmatprep.subr.mxu0 0.0
        %455 = vmatpush1.msra.mxu0 0.0
        %456 = vmatprep.subr.mxu0 0.0
        %457 = vmatpush1.msra.mxu0 0.0
        %458 = vmatprep.subr.mxu0 0.0
        %459 = vmatpush1.msra.mxu0 0.0
        %460 = vmatprep.subr.mxu0 0.0
        %461 = vmatpush1.msra.mxu0 0.0
        %462 = vmatprep.subr.mxu0 0.0
        %463 = vmatpush1.msra.mxu0 0.0
        %464 = vmatprep.subr.mxu0 0.0
        %465 = vmatpush1.msra.mxu0 0.0
        %466 = vmatprep.subr.mxu0 0.0
        %467 = vmatpush1.msra.mxu0 0.0
        %468 = vmatprep.subr.mxu0 0.0
        %469 = vmatpush1.msra.mxu0 0.0
        %470 = vmatprep.mubr.f32.mxu0 0.0
        %471 = vmatmul.mubr.f32.gmra.mrb[0].mxu0 %v404
        %v472 = vpop.f32.mrb[0].mxu0
        %v473 = vadd.f32 %v400, %v472
        %v474 = vpop.f32.mrb[0].mxu0
        %475 = vdwg.mxu0
        %v476 = vadd.f32 %v473, %v274
        %477 = vst.msk [vmem:[%s269] sm:$0xff] %vm275, %v476
        %s478 = sand.u32 %s181, 1
        %s479 = scalar_lea.sflag [#allocation3], %s478
        %s480 = sand.u32 %s181, 1
        %s481 = smul.addr %s480, 8
        %s482 = scalar_lea.vmem [#allocation2], %s481
        // Predicated region
        $region49: #{tpu_custom_call.1} parent=47 // pred_check
          %p483 = pneg %p191
        $region50: #{tpu_custom_call.1} parent=47 // pred_check_branch
          %485 = sbr.rel (%p483) target = $region52
        $region51: #{tpu_custom_call.1} parent=47 // pred_region
          %s487 = ssub.s32 128, 128
          %488 = vsyncadd %s479, %s487
          %s489 = smul.addr %s21, 128
          %s490 = scalar_lea.hbm %s7, %s489
          %s492 = sshll.u32 %s482, 4
          %s493 = int_to_ptr.vmem [resolvable:$true] %s492
          %495 = dma.vmem_to_hbm [thread:$0]  %s493, 128, %s490, %s479
        $region52: #{tpu_custom_call.1} parent=47 // pred_fallthru
          _
      $region48: #{tpu_custom_call.1} parent=5 // pred_fallthru
        _
      %p496 = scmp.le.s32.totalorder 2, %s16
      // Predicated region
      $region53: #{tpu_custom_call.1} parent=5 // pred_check
        %p497 = pneg %p496
      $region54: #{tpu_custom_call.1} parent=5 // pred_check_branch
        %499 = sbr.rel (%p497) target = $region56
      $region55: #{tpu_custom_call.1} parent=5 // pred_region
        %s500 = ssub.s32 %s16, 2
        // Predicated region
        $region57: #{tpu_custom_call.1} parent=55 // pred_check
          %p501 = pneg %p197
        $region58: #{tpu_custom_call.1} parent=55 // pred_check_branch
          %503 = sbr.rel (%p501) target = $region60
        $region59: #{tpu_custom_call.1} parent=55 // pred_region
          %s504 = sand.u32 %s182, 1
          %s505 = scalar_lea.sflag [#allocation3], %s504
          %s506 = sand.u32 %s182, 1
          %s507 = smul.addr %s506, 8
          %s508 = scalar_lea.vmem [#allocation2], %s507
          %509 = dma.done %s505, 128
        $region60: #{tpu_custom_call.1} parent=55 // pred_fallthru
          _
      $region56: #{tpu_custom_call.1} parent=5 // pred_fallthru
        _
    $region6: #{tpu_custom_call.1} parent=1 // loop_footer
      %s20 = sadd.s32 1, %s16
    $region7: #{tpu_custom_call.1} parent=1 // loop_footer_branch
      %15 = sbr.rel target = $region3
    $region8: #{tpu_custom_call.1} parent=1 // loop_exit
      _
    %510 = vsyncpa [#allocation3], 1
    %s511 = scalar_lea.sflag [#allocation3], 1
    %512 = vsyncpa %s511, 1

</llo_original>
